<compile_context>
chip_gen: v5e
topology: v5e:2x2
jax: 0.10.0
libtpu: 0.0.40
codegen_flags: <defaults>
</compile_context>

<pallas_src>
import functools

import jax
import jax.numpy as jnp
from jax.experimental import pallas as pl
from jax.experimental.pallas import tpu as pltpu

NEG_SLOPE = 0.01  # nn.LeakyReLU() default negative_slope


def _round_up(n, m):
    return ((n + m - 1) // m) * m


def _leaky_relu_f32(x):
    # Acts on the f32 accumulator; stays on the f32 VPU path (v5e-safe).
    return jnp.where(x >= 0, x, NEG_SLOPE * x)


def _vmem_capacity_bytes():
    try:
        return int(pltpu.get_tpu_info().vmem_capacity_bytes)
    except Exception:
        return 64 << 20  # conservative fallback (v7x per-TensorCore VMEM)


def relu_mlp_kernel(x_ref, w1_ref, b1_ref, w2_ref, b2_ref, o_ref, acc_ref, *,
                    precision):
    """One (row-tile i, hidden-tile j) step of the fused 2-layer MLP."""
    j = pl.program_id(1)

    @pl.when(j == 0)
    def _():
        acc_ref[...] = jnp.zeros_like(acc_ref)

    # Layer 1 partial: hidden slice j.  MXU matmul with f32 accumulation; bias
    # add + LeakyReLU happen on the f32 result (single f32 epilogue).
    h = jnp.dot(x_ref[...], w1_ref[...],
                preferred_element_type=jnp.float32, precision=precision)
    h = _leaky_relu_f32(h + b1_ref[...])

    # Layer 2 partial: accumulate this hidden slice's contribution into the
    # f32 scratch.  The cast feeds the MXU in the compute dtype (bf16 by
    # default); it is a no-op on the exact-f32 path.
    acc_ref[...] += jnp.dot(h.astype(w2_ref.dtype), w2_ref[...],
                            preferred_element_type=jnp.float32,
                            precision=precision)

    @pl.when(j == pl.num_programs(1) - 1)
    def _():
        y = _leaky_relu_f32(acc_ref[...] + b2_ref[...])
        o_ref[...] = y.astype(o_ref.dtype)


def make_relu_mlp(w1, b1, w2, b2, *, exact_f32=False, th=None):
    """Pad/cast the parameters ONCE and return a `forward(x, tm=None)` callable.

    w1: [input_dim, hidden_dim]   b1: [hidden_dim] or [1, hidden_dim]
    w2: [hidden_dim, output_dim]  b2: [output_dim] or [1, output_dim]
    Weights are stored pre-transposed vs. torch ([in, out]), so the kernel
    computes x @ W + b == x @ W_torch.T + b.
    """
    input_dim, hidden_dim = w1.shape
    output_dim = w2.shape[1]

    cdt = jnp.float32 if exact_f32 else jnp.bfloat16      # MXU input dtype
    precision = jax.lax.Precision.HIGHEST if exact_f32 else None
    isize = jnp.dtype(cdt).itemsize
    vmem_cap = _vmem_capacity_bytes()

    # Lane-align feature dims (exact: zero pads contribute zero products,
    # leaky_relu(0) = 0, padded output lanes are sliced off outside the kernel).
    Kp = _round_up(input_dim, 128)
    Np = _round_up(output_dim, 128)
    Hp0 = _round_up(hidden_dim, 128)

    # Hidden tile: biggest multiple of 128 whose working set (assuming a
    # worst-case 512-row tile) fits in ~55% of this chip's VMEM.
    if th is None:
        tm_budget = 512
        budget = int(0.55 * vmem_cap)
        fixed = (2 * tm_budget * Kp * isize       # x tile stream (double-buffered)
                 + 2 * tm_budget * Np * 4         # out tile stream
                 + 2 * Np * 4                     # b2
                 + 2 * tm_budget * Np * 4)        # f32 acc scratch + epilogue temp
        per_th = (2 * Kp * isize                  # W1 slice (double-buffered)
                  + 2 * Np * isize                # W2 slice
                  + 2 * 4                         # b1 slice
                  + tm_budget * 4)                # f32 h intermediate
        avail = budget - fixed
        th = 128 if avail <= per_th * 128 else int((avail // per_th) // 128 * 128)
    th = max(128, _round_up(min(int(th), Hp0), 128))
    Hp = _round_up(Hp0, th)
    n_h = Hp // th

    # ---- one-time parameter padding / casting (cache the returned closure;
    # do NOT rebuild it every forward pass). ----
    def pad2(a, shape, dtype):
        if a.shape == shape and a.dtype == dtype:
            return a
        return jnp.zeros(shape, dtype).at[:a.shape[0], :a.shape[1]].set(
            a.astype(dtype))

    w1p = pad2(w1, (Kp, Hp), cdt)
    w2p = pad2(w2, (Hp, Np), cdt)
    b1p = pad2(jnp.asarray(b1, jnp.float32).reshape(1, -1), (1, Hp), jnp.float32)
    b2p = pad2(jnp.asarray(b2, jnp.float32).reshape(1, -1), (1, Np), jnp.float32)

    kernel = functools.partial(relu_mlp_kernel, precision=precision)

    def forward(x, tm=None):
        B, in_dim = x.shape
        assert in_dim == input_dim, "input feature mismatch"
        out_dtype = x.dtype

        # Row tile: one big tile for small B; for larger B balance the tiles
        # and keep >= 2 so both v7x TensorCores get work ("parallel" axis).
        if tm is None:
            if B <= 256:
                tm = _round_up(B, 8)
            else:
                n_tiles = max(pl.cdiv(B, 512), 2)
                tm = _round_up(pl.cdiv(B, n_tiles), 8)
        tm = max(8, _round_up(int(tm), 8))
        n_rows = pl.cdiv(B, tm)

        # Only the K (lane) dim of x may need padding; the batch dim stays
        # ragged (partial last row block handled by Pallas).
        if in_dim == Kp and x.dtype == cdt:
            xp = x
        else:
            xp = jnp.zeros((B, Kp), cdt).at[:, :in_dim].set(x.astype(cdt))

        # Chip-aware VMEM budget from the actual working set.
        osize = jnp.dtype(out_dtype).itemsize
        est = (2 * tm * Kp * isize             # x tile stream (double-buffered)
               + 2 * tm * Np * osize           # out tile stream
               + 2 * Kp * th * isize           # W1 slice
               + 2 * th * Np * isize           # W2 slice
               + 2 * th * 4 + 2 * Np * 4       # biases
               + tm * Np * 4                   # f32 accumulator scratch
               + tm * th * 4                   # f32 h intermediate
               + tm * Np * 4)                  # epilogue temp
        vmem_limit = int(min(max(int(1.5 * est) + (2 << 20), 16 << 20),
                             int(0.9 * vmem_cap)))

        out_padded = pl.pallas_call(
            kernel,
            out_shape=jax.ShapeDtypeStruct((B, Np), out_dtype),
            grid_spec=pltpu.PrefetchScalarGridSpec(
                num_scalar_prefetch=0,
                grid=(n_rows, n_h),
                in_specs=[
                    pl.BlockSpec((tm, Kp), lambda i, j: (i, 0)),   # x row tile
                    pl.BlockSpec((Kp, th), lambda i, j: (0, j)),   # W1 hidden slice
                    pl.BlockSpec((1, th), lambda i, j: (0, j)),    # b1 hidden slice
                    pl.BlockSpec((th, Np), lambda i, j: (j, 0)),   # W2 hidden slice
                    pl.BlockSpec((1, Np), lambda i, j: (0, 0)),    # b2 (resident)
                ],
                out_specs=pl.BlockSpec((tm, Np), lambda i, j: (i, 0)),  # lane-dense
                scratch_shapes=[pltpu.VMEM((tm, Np), jnp.float32)],
            ),
            compiler_params=pltpu.CompilerParams(
                dimension_semantics=("parallel", "arbitrary"),
                vmem_limit_bytes=vmem_limit,
            ),
        )(xp, w1p, b1p, w2p, b2p)

        # Strip output-lane padding outside the kernel.
        return out_padded[:, :output_dim]

    return forward


def relu_mlp(x, w1, b1, w2, b2, *, tm=None, th=None, exact_f32=False):
    """One-shot convenience wrapper (prefer caching make_relu_mlp's closure)."""
    return make_relu_mlp(w1, b1, w2, b2, exact_f32=exact_f32, th=th)(x, tm=tm)


def relu_mlp_ref(x, w1, b1, w2, b2):
    hp = jax.lax.Precision.HIGHEST
    h = jnp.dot(x, w1, precision=hp) + b1.reshape(1, -1)
    h = jnp.where(h >= 0, h, NEG_SLOPE * h)
    y = jnp.dot(h, w2, precision=hp) + b2.reshape(1, -1)
    return jnp.where(y >= 0, y, NEG_SLOPE * y)


if __name__ == "__main__":
    key = jax.random.PRNGKey(0)

    def init_params(k, input_dim, hidden_dim, output_dim):
        kw1, kb1, kw2, kb2 = jax.random.split(k, 4)
        bound1 = 1.0 / jnp.sqrt(input_dim)
        bound2 = 1.0 / jnp.sqrt(hidden_dim)
        # torch nn.Linear stores W as [out, in]; we keep it pre-transposed [in, out].
        w1 = jax.random.uniform(kw1, (input_dim, hidden_dim), jnp.float32, -bound1, bound1)
        b1 = jax.random.uniform(kb1, (hidden_dim,), jnp.float32, -bound1, bound1)
        w2 = jax.random.uniform(kw2, (hidden_dim, output_dim), jnp.float32, -bound2, bound2)
        b2 = jax.random.uniform(kb2, (output_dim,), jnp.float32, -bound2, bound2)
        return w1, b1, w2, b2

    k1, k2, kx1, kx2 = jax.random.split(key, 4)

    # Case 1: ReLuMLP(input_dim=16, hidden_dim=32, output_dim=8), batch=64.
    w1, b1, w2, b2 = init_params(k1, 16, 32, 8)
    x = jax.random.normal(kx1, (64, 16), jnp.float32)
    ref = relu_mlp_ref(x, w1, b1, w2, b2)

    out_bf16 = jax.block_until_ready(relu_mlp(x, w1, b1, w2, b2))               # default bf16 MXU path
    out_f32 = jax.block_until_ready(relu_mlp(x, w1, b1, w2, b2, exact_f32=True))
    assert out_bf16.shape == (64, 8) and out_f32.shape == (64, 8)
    assert jnp.allclose(out_f32, ref, atol=1e-5, rtol=1e-5), "exact-f32 mismatch"
    assert jnp.allclose(out_bf16, ref, atol=5e-2, rtol=5e-2), "bf16 mismatch"

    # Case 2: ragged batch + multiple row tiles + multiple hidden tiles +
    # unaligned feature dims (exercises the tiled/accumulator code path).
    w1, b1, w2, b2 = init_params(k2, 48, 160, 24)
    x = jax.random.normal(kx2, (300, 48), jnp.float32)
    ref = relu_mlp_ref(x, w1, b1, w2, b2)
    out = jax.block_until_ready(
        relu_mlp(x, w1, b1, w2, b2, tm=128, th=128, exact_f32=True))
    assert out.shape == (300, 24)
    assert jnp.allclose(out, ref, atol=1e-5, rtol=1e-5), "tiled-path mismatch"

    print("KERNEL_OK")
</pallas_src>

<mosaic_0001>
module attributes {stable_mosaic.version = 11 : i64} {
  func.func @relu_mlp_kernel(%arg0: i32, %arg1: i32, %arg2: memref<64x128xbf16, #tpu.memory_space<vmem>>, %arg3: memref<128x128xbf16, #tpu.memory_space<vmem>>, %arg4: memref<1x128xf32, #tpu.memory_space<vmem>>, %arg5: memref<128x128xbf16, #tpu.memory_space<vmem>>, %arg6: memref<1x128xf32, #tpu.memory_space<vmem>>, %arg7: memref<64x128xf32, #tpu.memory_space<vmem>>, %arg8: memref<64x128xf32, #tpu.memory_space<vmem>>) attributes {dimension_semantics = [#tpu.dimension_semantics<parallel>, #tpu.dimension_semantics<arbitrary>], iteration_bounds = array<i64: 1, 1>, scalar_prefetch = 0 : i64, scratch_operands = 1 : i64, tpu.core_type = #tpu.core_type<tc>, window_params = [{transform_indices = @transform_0, window_bounds = array<i64: 64, 128>}, {transform_indices = @transform_1, window_bounds = array<i64: 128, 128>}, {transform_indices = @transform_2, window_bounds = array<i64: 1, 128>}, {transform_indices = @transform_3, window_bounds = array<i64: 128, 128>}, {pipeline_mode = #tpu.pipeline_mode<synchronous>, transform_indices = @transform_4, window_bounds = array<i64: 1, 128>}, {transform_indices = @transform_5, window_bounds = array<i64: 64, 128>}]} {
    %c0_i32 = arith.constant 0 : i32
    %0 = arith.cmpi eq, %arg1, %c0_i32 : i32
    %1 = arith.extui %0 : i1 to i32
    %c0_i32_0 = arith.constant 0 : i32
    %2 = arith.cmpi ne, %1, %c0_i32_0 : i32
    scf.if %2 {
      %cst_17 = arith.constant 0.000000e+00 : f32
      %23 = vector.broadcast %cst_17 : f32 to vector<64x128xf32>
      %c0_18 = arith.constant 0 : index
      %c0_19 = arith.constant 0 : index
      %24 = vector.load %arg8[%c0_18, %c0_19] : memref<64x128xf32, #tpu.memory_space<vmem>>, vector<64x128xf32>
      tpu.vector_store %arg8[%c0_18, %c0_19], %23 {strides = array<i32>} : memref<64x128xf32, #tpu.memory_space<vmem>>, vector<64x128xf32>,
    } else {
    }
    %c0 = arith.constant 0 : index
    %c0_1 = arith.constant 0 : index
    %3 = vector.load %arg2[%c0, %c0_1] : memref<64x128xbf16, #tpu.memory_space<vmem>>, vector<64x128xbf16>
    %c0_2 = arith.constant 0 : index
    %c0_3 = arith.constant 0 : index
    %4 = vector.load %arg3[%c0_2, %c0_3] : memref<128x128xbf16, #tpu.memory_space<vmem>>, vector<128x128xbf16>
    %cst = arith.constant dense<0.000000e+00> : vector<64x128xf32>
    %5 = tpu.matmul %3, %4, %cst {dimension_numbers = #tpu.dot_dimension_numbers<[1], [0], [0], [1], [0, 0, 1, 1], [], []>} : vector<64x128xbf16>, vector<128x128xbf16>, vector<64x128xf32> -> vector<64x128xf32>
    %c0_4 = arith.constant 0 : index
    %c0_5 = arith.constant 0 : index
    %6 = vector.load %arg4[%c0_4, %c0_5] : memref<1x128xf32, #tpu.memory_space<vmem>>, vector<1x128xf32>
    %7 = vector.broadcast %6 : vector<1x128xf32> to vector<64x128xf32>
    %8 = arith.addf %5, %7 : vector<64x128xf32>
    %cst_6 = arith.constant 0.000000e+00 : f32
    %9 = vector.broadcast %cst_6 : f32 to vector<64x128xf32>
    %10 = arith.cmpf oge, %8, %9 : vector<64x128xf32>
    %cst_7 = arith.constant 0.00999999977 : f32
    %11 = vector.broadcast %cst_7 : f32 to vector<64x128xf32>
    %12 = arith.mulf %11, %8 : vector<64x128xf32>
    %13 = arith.select %10, %8, %12 : vector<64x128xi1>, vector<64x128xf32>
    %c0_8 = arith.constant 0 : index
    %c0_9 = arith.constant 0 : index
    %14 = vector.load %arg8[%c0_8, %c0_9] : memref<64x128xf32, #tpu.memory_space<vmem>>, vector<64x128xf32>
    %15 = arith.truncf %13 : vector<64x128xf32> to vector<64x128xbf16>
    %c0_10 = arith.constant 0 : index
    %c0_11 = arith.constant 0 : index
    %16 = vector.load %arg5[%c0_10, %c0_11] : memref<128x128xbf16, #tpu.memory_space<vmem>>, vector<128x128xbf16>
    %cst_12 = arith.constant dense<0.000000e+00> : vector<64x128xf32>
    %17 = tpu.matmul %15, %16, %cst_12 {dimension_numbers = #tpu.dot_dimension_numbers<[1], [0], [0], [1], [0, 0, 1, 1], [], []>} : vector<64x128xbf16>, vector<128x128xbf16>, vector<64x128xf32> -> vector<64x128xf32>
    %18 = arith.addf %14, %17 : vector<64x128xf32>
    %c0_13 = arith.constant 0 : index
    %c0_14 = arith.constant 0 : index
    %19 = vector.load %arg8[%c0_13, %c0_14] : memref<64x128xf32, #tpu.memory_space<vmem>>, vector<64x128xf32>
    tpu.vector_store %arg8[%c0_13, %c0_14], %18 {strides = array<i32>} : memref<64x128xf32, #tpu.memory_space<vmem>>, vector<64x128xf32>,
    %c0_i32_15 = arith.constant 0 : i32
    %20 = arith.cmpi eq, %arg1, %c0_i32_15 : i32
    %21 = arith.extui %20 : i1 to i32
    %c0_i32_16 = arith.constant 0 : i32
    %22 = arith.cmpi ne, %21, %c0_i32_16 : i32
    scf.if %22 {
      %c0_17 = arith.constant 0 : index
      %c0_18 = arith.constant 0 : index
      %23 = vector.load %arg8[%c0_17, %c0_18] : memref<64x128xf32, #tpu.memory_space<vmem>>, vector<64x128xf32>
      %c0_19 = arith.constant 0 : index
      %c0_20 = arith.constant 0 : index
      %24 = vector.load %arg6[%c0_19, %c0_20] : memref<1x128xf32, #tpu.memory_space<vmem>>, vector<1x128xf32>
      %25 = vector.broadcast %24 : vector<1x128xf32> to vector<64x128xf32>
      %26 = arith.addf %23, %25 : vector<64x128xf32>
      %cst_21 = arith.constant 0.000000e+00 : f32
      %27 = vector.broadcast %cst_21 : f32 to vector<64x128xf32>
      %28 = arith.cmpf oge, %26, %27 : vector<64x128xf32>
      %cst_22 = arith.constant 0.00999999977 : f32
      %29 = vector.broadcast %cst_22 : f32 to vector<64x128xf32>
      %30 = arith.mulf %29, %26 : vector<64x128xf32>
      %31 = arith.select %28, %26, %30 : vector<64x128xi1>, vector<64x128xf32>
      %c0_23 = arith.constant 0 : index
      %c0_24 = arith.constant 0 : index
      %32 = vector.load %arg7[%c0_23, %c0_24] : memref<64x128xf32, #tpu.memory_space<vmem>>, vector<64x128xf32>
      tpu.vector_store %arg7[%c0_23, %c0_24], %31 {strides = array<i32>} : memref<64x128xf32, #tpu.memory_space<vmem>>, vector<64x128xf32>,
    } else {
    }
    return
  }
  func.func @transform_0(%arg0: i32, %arg1: i32) -> (i32, i32) {
    %c0_i32 = arith.constant 0 : i32
    %c0_i32_0 = arith.constant 0 : i32
    return %arg0, %c0_i32 : i32, i32
  }
  func.func @transform_1(%arg0: i32, %arg1: i32) -> (i32, i32) {
    %c0_i32 = arith.constant 0 : i32
    %c0_i32_0 = arith.constant 0 : i32
    return %c0_i32, %arg1 : i32, i32
  }
  func.func @transform_2(%arg0: i32, %arg1: i32) -> (i32, i32) {
    %c0_i32 = arith.constant 0 : i32
    %c0_i32_0 = arith.constant 0 : i32
    return %c0_i32, %arg1 : i32, i32
  }
  func.func @transform_3(%arg0: i32, %arg1: i32) -> (i32, i32) {
    %c0_i32 = arith.constant 0 : i32
    %c0_i32_0 = arith.constant 0 : i32
    return %arg1, %c0_i32 : i32, i32
  }
  func.func @transform_4(%arg0: i32, %arg1: i32) -> (i32, i32) {
    %c0_i32 = arith.constant 0 : i32
    %c0_i32_0 = arith.constant 0 : i32
    %c0_i32_1 = arith.constant 0 : i32
    return %c0_i32, %c0_i32_0 : i32, i32
  }
  func.func @transform_5(%arg0: i32, %arg1: i32) -> (i32, i32) {
    %c0_i32 = arith.constant 0 : i32
    %c0_i32_0 = arith.constant 0 : i32
    return %arg0, %c0_i32 : i32, i32
  }
}

</mosaic_0001>

<llo_original>
// kernel: tpu_custom_call.1
$region0: #{tpu_custom_call.1}
  #allocation0 [shape = 'u32[]', space=smem, size = 0x4, offset = 0x4, fixed_abs, tag = 'smem constant byte address 0x4 - core index']
  #allocation1 [shape = 'u32[72,128]{1,0:T(1,128)}', space=vmem, size = 0x9000, scoped, tag = 'internal scratch']
  #allocation2 [shape = 'f32[64,128]{1,0:T(8,128)}', space=vmem, size = 0x8000, scoped, tag = 'scratch operand']
  %s0 = inlined_call_operand.hbm [shape: bf16[64,128], index: 0, kind: input, shape index: {}]
  %s1 = inlined_call_operand.hbm [shape: bf16[128,128], index: 1, kind: input, shape index: {}]
  %s2 = inlined_call_operand.vmem [shape: f32[1,128], index: 2, kind: input, shape index: {}]
  %s3 = inlined_call_operand.hbm [shape: bf16[128,128], index: 3, kind: input, shape index: {}]
  %s4 = inlined_call_operand.vmem [shape: f32[1,128], index: 4, kind: input, shape index: {}]
  %s5 = inlined_call_operand.hbm [shape: f32[64,128], index: 5, kind: output, shape index: {}]
  %s6 = sld [smem:[#allocation0]]
  $region50: #{tpu_custom_call.1} parent=0
    _
  %s8 = ssub.s32 1, %s6
  %s9 = scalar_select 0, %s8, %s6
  $region1: #{tpu_custom_call.1} parent=0
    #allocation3 [shape = 'u8[16384]{0}', space=vmem, size = 0x4000, scoped, tag = 'input window, operand 0, single buffered']
    #allocation4 [shape = 's32[1]{0}', space=sflag, size = 0x4, scoped, tag = 'scoped memory for tpu_custom_call.1']
    #allocation5 [shape = 's32[1]{0}', space=sflag, size = 0x4, scoped, tag = 'scoped memory for tpu_custom_call.1']
    #allocation6 [shape = 'u8[32768]{0}', space=vmem, size = 0x8000, scoped, tag = 'input window, operand 1, single buffered']
    #allocation7 [shape = 's32[1]{0}', space=sflag, size = 0x4, scoped, tag = 'scoped memory for tpu_custom_call.1']
    #allocation8 [shape = 'u8[32768]{0}', space=vmem, size = 0x8000, scoped, tag = 'input window, operand 3, single buffered']
    #allocation9 [shape = 'u8[32768]{0}', space=vmem, size = 0x8000, scoped, tag = 'output window, operand 0, single buffered']
    %10 = vsyncpa [#allocation4], 0
    %11 = vsyncpa [#allocation7], 0
    %12 = vsyncpa [#allocation5], 0
    // Predicated region
    $region2: #{tpu_custom_call.1} parent=1 // pred_check
      _
    $region3: #{tpu_custom_call.1} parent=1 // pred_check_branch
      %14 = sbr.rel (0) target = $region5
    $region4: #{tpu_custom_call.1} parent=1 // pred_region
      %16 = vsyncadd [#allocation4], 0
      %s17 = sshll.u32 %s0, 4
      %s18 = int_to_ptr.hbm [resolvable:$true] %s17
      %s19 = sshll.u32 [#allocation3], 4
      %s20 = int_to_ptr.vmem [resolvable:$true] %s19
      %25 = dma.hbm_to_vmem [thread:$0]  %s18, 512, %s20, [#allocation4], 64, 64, 4
    $region5: #{tpu_custom_call.1} parent=1 // pred_fallthru
      _
    // Predicated region
    $region6: #{tpu_custom_call.1} parent=1 // pred_check
      _
    $region7: #{tpu_custom_call.1} parent=1 // pred_check_branch
      %27 = sbr.rel (0) target = $region9
    $region8: #{tpu_custom_call.1} parent=1 // pred_region
      %29 = vsyncadd [#allocation7], 0
      %s30 = sshll.u32 %s1, 4
      %s31 = int_to_ptr.hbm [resolvable:$true] %s30
      %s32 = sshll.u32 [#allocation6], 4
      %s33 = int_to_ptr.vmem [resolvable:$true] %s32
      %38 = dma.hbm_to_vmem [thread:$0]  %s31, 1024, %s33, [#allocation7], 64, 64, 4
    $region9: #{tpu_custom_call.1} parent=1 // pred_fallthru
      _
    // Predicated region
    $region10: #{tpu_custom_call.1} parent=1 // pred_check
      _
    $region11: #{tpu_custom_call.1} parent=1 // pred_check_branch
      %40 = sbr.rel (0) target = $region13
    $region12: #{tpu_custom_call.1} parent=1 // pred_region
      _
    $region13: #{tpu_custom_call.1} parent=1 // pred_fallthru
      _
    // Predicated region
    $region14: #{tpu_custom_call.1} parent=1 // pred_check
      _
    $region15: #{tpu_custom_call.1} parent=1 // pred_check_branch
      %42 = sbr.rel (0) target = $region17
    $region16: #{tpu_custom_call.1} parent=1 // pred_region
      %44 = vsyncadd [#allocation7], 0
      %s45 = sshll.u32 %s3, 4
      %s46 = int_to_ptr.hbm [resolvable:$true] %s45
      %s47 = sshll.u32 [#allocation8], 4
      %s48 = int_to_ptr.vmem [resolvable:$true] %s47
      %53 = dma.hbm_to_vmem [thread:$0]  %s46, 1024, %s48, [#allocation7], 64, 64, 4
    $region17: #{tpu_custom_call.1} parent=1 // pred_fallthru
      _
    // Predicated region
    $region18: #{tpu_custom_call.1} parent=1 // pred_check
      _
    $region19: #{tpu_custom_call.1} parent=1 // pred_check_branch
      %55 = sbr.rel (0) target = $region21
    $region20: #{tpu_custom_call.1} parent=1 // pred_region
      _
    $region21: #{tpu_custom_call.1} parent=1 // pred_fallthru
      _
    // Predicated region
    $region22: #{tpu_custom_call.1} parent=1 // pred_check
      _
    $region23: #{tpu_custom_call.1} parent=1 // pred_check_branch
      %57 = sbr.rel (0) target = $region25
    $region24: #{tpu_custom_call.1} parent=1 // pred_region
      %59 = dma.done [#allocation4], 512
    $region25: #{tpu_custom_call.1} parent=1 // pred_fallthru
      _
    // Predicated region
    $region26: #{tpu_custom_call.1} parent=1 // pred_check
      _
    $region27: #{tpu_custom_call.1} parent=1 // pred_check_branch
      %61 = sbr.rel (0) target = $region29
    $region28: #{tpu_custom_call.1} parent=1 // pred_region
      %63 = dma.done [#allocation7], 1024
    $region29: #{tpu_custom_call.1} parent=1 // pred_fallthru
      _
    // Predicated region
    $region30: #{tpu_custom_call.1} parent=1 // pred_check
      _
    $region31: #{tpu_custom_call.1} parent=1 // pred_check_branch
      %65 = sbr.rel (0) target = $region33
    $region32: #{tpu_custom_call.1} parent=1 // pred_region
      %67 = dma.done [#allocation7], 1024
    $region33: #{tpu_custom_call.1} parent=1 // pred_fallthru
      _
    %p68 = scmp.eq.s32.totalorder 0, 0
    // Predicated region
    $region34: #{tpu_custom_call.1} parent=1 // pred_check
      %p69 = pneg %p68
    $region35: #{tpu_custom_call.1} parent=1 // pred_check_branch
      %71 = sbr.rel (%p69) target = $region37
    $region36: #{tpu_custom_call.1} parent=1 // pred_region
      %72 = vst [vmem:[#allocation2] sm:$0xff] 0.0
      %73 = vst [vmem:[#allocation2 + $0x8] sm:$0xff] 0.0
      %74 = vst [vmem:[#allocation2 + $0x10] sm:$0xff] 0.0
      %75 = vst [vmem:[#allocation2 + $0x18] sm:$0xff] 0.0
      %76 = vst [vmem:[#allocation2 + $0x20] sm:$0xff] 0.0
      %77 = vst [vmem:[#allocation2 + $0x28] sm:$0xff] 0.0
      %78 = vst [vmem:[#allocation2 + $0x30] sm:$0xff] 0.0
      %79 = vst [vmem:[#allocation2 + $0x38] sm:$0xff] 0.0
    $region37: #{tpu_custom_call.1} parent=1 // pred_fallthru
      _
    %v80 = vld [vmem:[#allocation3] sm:$0xf]
    %v81 = vld [vmem:[#allocation3 + $0x4] sm:$0xf]
    %v82 = vld [vmem:[#allocation3 + $0x8] sm:$0xf]
    %v83 = vld [vmem:[#allocation3 + $0xc] sm:$0xf]
    %v84 = vld [vmem:[#allocation3 + $0x10] sm:$0xf]
    %v85 = vld [vmem:[#allocation3 + $0x14] sm:$0xf]
    %v86 = vld [vmem:[#allocation3 + $0x18] sm:$0xf]
    %v87 = vld [vmem:[#allocation3 + $0x1c] sm:$0xf]
    %v88 = vld [vmem:[#allocation6] sm:$0xf]
    %v89 = vld [vmem:[#allocation6 + $0x4] sm:$0xf]
    %v90 = vld [vmem:[#allocation6 + $0x8] sm:$0xf]
    %v91 = vld [vmem:[#allocation6 + $0xc] sm:$0xf]
    %v92 = vld [vmem:[#allocation6 + $0x10] sm:$0xf]
    %v93 = vld [vmem:[#allocation6 + $0x14] sm:$0xf]
    %v94 = vld [vmem:[#allocation6 + $0x18] sm:$0xf]
    %v95 = vld [vmem:[#allocation6 + $0x1c] sm:$0xf]
    %v96 = vld [vmem:[#allocation6 + $0x20] sm:$0xf]
    %v97 = vld [vmem:[#allocation6 + $0x24] sm:$0xf]
    %v98 = vld [vmem:[#allocation6 + $0x28] sm:$0xf]
    %v99 = vld [vmem:[#allocation6 + $0x2c] sm:$0xf]
    %v100 = vld [vmem:[#allocation6 + $0x30] sm:$0xf]
    %v101 = vld [vmem:[#allocation6 + $0x34] sm:$0xf]
    %v102 = vld [vmem:[#allocation6 + $0x38] sm:$0xf]
    %v103 = vld [vmem:[#allocation6 + $0x3c] sm:$0xf]
    %v104 = vld [vmem:[%s2] sm:$0x1]
    %v106 = vperm.slane %v104, 0
    %v116 = vunpack.c.l.b16 %v80
    %v117 = vunpack.c.l.b16 %v81
    %v118 = vunpack.c.l.b16 %v82
    %v119 = vunpack.c.l.b16 %v83
    %v120 = vunpack.c.l.b16 %v84
    %v121 = vunpack.c.l.b16 %v85
    %v122 = vunpack.c.l.b16 %v86
    %v123 = vunpack.c.l.b16 %v87
    %v124 = vpack.c.b16 %v117, %v116
    %v125 = vpack.c.b16 %v119, %v118
    %v126 = vpack.c.b16 %v121, %v120
    %v127 = vpack.c.b16 %v123, %v122
    %v148 = vunpack.c.l.b16 %v88
    %v149 = vunpack.c.l.b16 %v89
    %v150 = vunpack.c.l.b16 %v90
    %v151 = vunpack.c.l.b16 %v91
    %v152 = vunpack.c.l.b16 %v92
    %v153 = vunpack.c.l.b16 %v93
    %v154 = vunpack.c.l.b16 %v94
    %v155 = vunpack.c.l.b16 %v95
    %v156 = vunpack.c.l.b16 %v96
    %v157 = vunpack.c.l.b16 %v97
    %v158 = vunpack.c.l.b16 %v98
    %v159 = vunpack.c.l.b16 %v99
    %v160 = vunpack.c.l.b16 %v100
    %v161 = vunpack.c.l.b16 %v101
    %v162 = vunpack.c.l.b16 %v102
    %v163 = vunpack.c.l.b16 %v103
    %v164 = vpack.c.b16 %v149, %v148
    %v165 = vpack.c.b16 %v151, %v150
    %v166 = vpack.c.b16 %v153, %v152
    %v167 = vpack.c.b16 %v155, %v154
    %v168 = vpack.c.b16 %v157, %v156
    %v169 = vpack.c.b16 %v159, %v158
    %v170 = vpack.c.b16 %v161, %v160
    %v171 = vpack.c.b16 %v163, %v162
    %180 = vmatpush.bf16.msra.mxu0 %v171
    %181 = vmatpush.bf16.msra.mxu0 %v170
    %182 = vmatpush.bf16.msra.mxu0 %v169
    %183 = vmatpush.bf16.msra.mxu0 %v168
    %184 = vmatpush.bf16.msra.mxu0 %v167
    %185 = vmatpush.bf16.msra.mxu0 %v166
    %186 = vmatpush.bf16.msra.mxu0 %v165
    %187 = vmatpush.bf16.msra.mxu0 %v164
    %188 = vmatmul.bf16.gmra.mxu0 %v124
    %v189 = vpop.f32.mrf.mxu0
    %v190 = vadd.f32 %v106, %v189
    %v191 = vpop.f32.mrf.mxu0
    %v192 = vadd.f32 %v106, %v191
    %193 = vmatmul.bf16.gmra.mxu0 %v125
    %v194 = vpop.f32.mrf.mxu0
    %v195 = vadd.f32 %v106, %v194
    %v196 = vpop.f32.mrf.mxu0
    %v197 = vadd.f32 %v106, %v196
    %198 = vmatmul.bf16.gmra.mxu0 %v126
    %v199 = vpop.f32.mrf.mxu0
    %v200 = vadd.f32 %v106, %v199
    %v201 = vpop.f32.mrf.mxu0
    %v202 = vadd.f32 %v106, %v201
    %203 = vmatmul.bf16.gmra.mxu0 %v127
    %v204 = vpop.f32.mrf.mxu0
    %v205 = vadd.f32 %v106, %v204
    %v206 = vpop.f32.mrf.mxu0
    %v207 = vadd.f32 %v106, %v206
    %208 = vdwg.mxu0
    %vm209 = vcmp.ge.f32.partialorder %v190, 0.0
    %vm210 = vcmp.ge.f32.partialorder %v192, 0.0
    %vm211 = vcmp.ge.f32.partialorder %v195, 0.0
    %vm212 = vcmp.ge.f32.partialorder %v197, 0.0
    %vm213 = vcmp.ge.f32.partialorder %v200, 0.0
    %vm214 = vcmp.ge.f32.partialorder %v202, 0.0
    %vm215 = vcmp.ge.f32.partialorder %v205, 0.0
    %vm216 = vcmp.ge.f32.partialorder %v207, 0.0
    %v217 = vmul.f32 %v190, 0.01
    %v218 = vmul.f32 %v192, 0.01
    %v219 = vmul.f32 %v195, 0.01
    %v220 = vmul.f32 %v197, 0.01
    %v221 = vmul.f32 %v200, 0.01
    %v222 = vmul.f32 %v202, 0.01
    %v223 = vmul.f32 %v205, 0.01
    %v224 = vmul.f32 %v207, 0.01
    %v225 = vsel %vm209, %v190, %v217
    %v226 = vsel %vm210, %v192, %v218
    %v227 = vsel %vm211, %v195, %v219
    %v228 = vsel %vm212, %v197, %v220
    %v229 = vsel %vm213, %v200, %v221
    %v230 = vsel %vm214, %v202, %v222
    %v231 = vsel %vm215, %v205, %v223
    %v232 = vsel %vm216, %v207, %v224
    %v233 = vld [vmem:[#allocation2] sm:$0xff]
    %v234 = vld [vmem:[#allocation2 + $0x8] sm:$0xff]
    %v235 = vld [vmem:[#allocation2 + $0x10] sm:$0xff]
    %v236 = vld [vmem:[#allocation2 + $0x18] sm:$0xff]
    %v237 = vld [vmem:[#allocation2 + $0x20] sm:$0xff]
    %v238 = vld [vmem:[#allocation2 + $0x28] sm:$0xff]
    %v239 = vld [vmem:[#allocation2 + $0x30] sm:$0xff]
    %v240 = vld [vmem:[#allocation2 + $0x38] sm:$0xff]
    %v241 = vpack.c.bf16 %v226, %v225
    %v242 = vpack.c.bf16 %v228, %v227
    %v243 = vpack.c.bf16 %v230, %v229
    %v244 = vpack.c.bf16 %v232, %v231
    %v245 = vld [vmem:[#allocation8] sm:$0xf]
    %v246 = vld [vmem:[#allocation8 + $0x4] sm:$0xf]
    %v247 = vld [vmem:[#allocation8 + $0x8] sm:$0xf]
    %v248 = vld [vmem:[#allocation8 + $0xc] sm:$0xf]
    %v249 = vld [vmem:[#allocation8 + $0x10] sm:$0xf]
    %v250 = vld [vmem:[#allocation8 + $0x14] sm:$0xf]
    %v251 = vld [vmem:[#allocation8 + $0x18] sm:$0xf]
    %v252 = vld [vmem:[#allocation8 + $0x1c] sm:$0xf]
    %v253 = vld [vmem:[#allocation8 + $0x20] sm:$0xf]
    %v254 = vld [vmem:[#allocation8 + $0x24] sm:$0xf]
    %v255 = vld [vmem:[#allocation8 + $0x28] sm:$0xf]
    %v256 = vld [vmem:[#allocation8 + $0x2c] sm:$0xf]
    %v257 = vld [vmem:[#allocation8 + $0x30] sm:$0xf]
    %v258 = vld [vmem:[#allocation8 + $0x34] sm:$0xf]
    %v259 = vld [vmem:[#allocation8 + $0x38] sm:$0xf]
    %v260 = vld [vmem:[#allocation8 + $0x3c] sm:$0xf]
    %v277 = vunpack.c.l.b16 %v245
    %v278 = vunpack.c.l.b16 %v246
    %v279 = vunpack.c.l.b16 %v247
    %v280 = vunpack.c.l.b16 %v248
    %v281 = vunpack.c.l.b16 %v249
    %v282 = vunpack.c.l.b16 %v250
    %v283 = vunpack.c.l.b16 %v251
    %v284 = vunpack.c.l.b16 %v252
    %v285 = vunpack.c.l.b16 %v253
    %v286 = vunpack.c.l.b16 %v254
    %v287 = vunpack.c.l.b16 %v255
    %v288 = vunpack.c.l.b16 %v256
    %v289 = vunpack.c.l.b16 %v257
    %v290 = vunpack.c.l.b16 %v258
    %v291 = vunpack.c.l.b16 %v259
    %v292 = vunpack.c.l.b16 %v260
    %v293 = vpack.c.b16 %v278, %v277
    %v294 = vpack.c.b16 %v280, %v279
    %v295 = vpack.c.b16 %v282, %v281
    %v296 = vpack.c.b16 %v284, %v283
    %v297 = vpack.c.b16 %v286, %v285
    %v298 = vpack.c.b16 %v288, %v287
    %v299 = vpack.c.b16 %v290, %v289
    %v300 = vpack.c.b16 %v292, %v291
    %309 = vmatpush.bf16.msra.mxu0 %v300
    %310 = vmatpush.bf16.msra.mxu0 %v299
    %311 = vmatpush.bf16.msra.mxu0 %v298
    %312 = vmatpush.bf16.msra.mxu0 %v297
    %313 = vmatpush.bf16.msra.mxu0 %v296
    %314 = vmatpush.bf16.msra.mxu0 %v295
    %315 = vmatpush.bf16.msra.mxu0 %v294
    %316 = vmatpush.bf16.msra.mxu0 %v293
    %317 = vmatmul.bf16.gmra.mxu0 %v241
    %v318 = vpop.f32.mrf.mxu0
    %v319 = vadd.f32 0.0, %v318
    %v320 = vpop.f32.mrf.mxu0
    %v321 = vadd.f32 0.0, %v320
    %322 = vmatmul.bf16.gmra.mxu0 %v242
    %v323 = vpop.f32.mrf.mxu0
    %v324 = vadd.f32 0.0, %v323
    %v325 = vpop.f32.mrf.mxu0
    %v326 = vadd.f32 0.0, %v325
    %327 = vmatmul.bf16.gmra.mxu0 %v243
    %v328 = vpop.f32.mrf.mxu0
    %v329 = vadd.f32 0.0, %v328
    %v330 = vpop.f32.mrf.mxu0
    %v331 = vadd.f32 0.0, %v330
    %332 = vmatmul.bf16.gmra.mxu0 %v244
    %v333 = vpop.f32.mrf.mxu0
    %v334 = vadd.f32 0.0, %v333
    %v335 = vpop.f32.mrf.mxu0
    %v336 = vadd.f32 0.0, %v335
    %337 = vdwg.mxu0
    %v338 = vadd.f32 %v233, %v319
    %v339 = vadd.f32 %v234, %v321
    %v340 = vadd.f32 %v235, %v324
    %v341 = vadd.f32 %v236, %v326
    %v342 = vadd.f32 %v237, %v329
    %v343 = vadd.f32 %v238, %v331
    %v344 = vadd.f32 %v239, %v334
    %v345 = vadd.f32 %v240, %v336
    %346 = vst [vmem:[#allocation2] sm:$0xff] %v338
    %347 = vst [vmem:[#allocation2 + $0x8] sm:$0xff] %v339
    %348 = vst [vmem:[#allocation2 + $0x10] sm:$0xff] %v340
    %349 = vst [vmem:[#allocation2 + $0x18] sm:$0xff] %v341
    %350 = vst [vmem:[#allocation2 + $0x20] sm:$0xff] %v342
    %351 = vst [vmem:[#allocation2 + $0x28] sm:$0xff] %v343
    %352 = vst [vmem:[#allocation2 + $0x30] sm:$0xff] %v344
    %353 = vst [vmem:[#allocation2 + $0x38] sm:$0xff] %v345
    // Predicated region
    $region38: #{tpu_custom_call.1} parent=1 // pred_check
      %p354 = pneg %p68
    $region39: #{tpu_custom_call.1} parent=1 // pred_check_branch
      %356 = sbr.rel (%p354) target = $region41
    $region40: #{tpu_custom_call.1} parent=1 // pred_region
      %v357 = vld [vmem:[#allocation2] sm:$0xff]
      %v358 = vld [vmem:[#allocation2 + $0x8] sm:$0xff]
      %v359 = vld [vmem:[#allocation2 + $0x10] sm:$0xff]
      %v360 = vld [vmem:[#allocation2 + $0x18] sm:$0xff]
      %v361 = vld [vmem:[#allocation2 + $0x20] sm:$0xff]
      %v362 = vld [vmem:[#allocation2 + $0x28] sm:$0xff]
      %v363 = vld [vmem:[#allocation2 + $0x30] sm:$0xff]
      %v364 = vld [vmem:[#allocation2 + $0x38] sm:$0xff]
      %v365 = vld [vmem:[%s4] sm:$0x1]
      %v367 = vperm.slane %v365, 0
      %v369 = vadd.f32 %v357, %v367
      %v370 = vadd.f32 %v358, %v367
      %v371 = vadd.f32 %v359, %v367
      %v372 = vadd.f32 %v360, %v367
      %v373 = vadd.f32 %v361, %v367
      %v374 = vadd.f32 %v362, %v367
      %v375 = vadd.f32 %v363, %v367
      %v376 = vadd.f32 %v364, %v367
      %vm377 = vcmp.ge.f32.partialorder %v369, 0.0
      %vm378 = vcmp.ge.f32.partialorder %v370, 0.0
      %vm379 = vcmp.ge.f32.partialorder %v371, 0.0
      %vm380 = vcmp.ge.f32.partialorder %v372, 0.0
      %vm381 = vcmp.ge.f32.partialorder %v373, 0.0
      %vm382 = vcmp.ge.f32.partialorder %v374, 0.0
      %vm383 = vcmp.ge.f32.partialorder %v375, 0.0
      %vm384 = vcmp.ge.f32.partialorder %v376, 0.0
      %v385 = vmul.f32 %v369, 0.01
      %v386 = vmul.f32 %v370, 0.01
      %v387 = vmul.f32 %v371, 0.01
      %v388 = vmul.f32 %v372, 0.01
      %v389 = vmul.f32 %v373, 0.01
      %v390 = vmul.f32 %v374, 0.01
      %v391 = vmul.f32 %v375, 0.01
      %v392 = vmul.f32 %v376, 0.01
      %v393 = vsel %vm377, %v369, %v385
      %v394 = vsel %vm378, %v370, %v386
      %v395 = vsel %vm379, %v371, %v387
      %v396 = vsel %vm380, %v372, %v388
      %v397 = vsel %vm381, %v373, %v389
      %v398 = vsel %vm382, %v374, %v390
      %v399 = vsel %vm383, %v375, %v391
      %v400 = vsel %vm384, %v376, %v392
      %401 = vst [vmem:[#allocation9] sm:$0xff] %v393
      %402 = vst [vmem:[#allocation9 + $0x8] sm:$0xff] %v394
      %403 = vst [vmem:[#allocation9 + $0x10] sm:$0xff] %v395
      %404 = vst [vmem:[#allocation9 + $0x18] sm:$0xff] %v396
      %405 = vst [vmem:[#allocation9 + $0x20] sm:$0xff] %v397
      %406 = vst [vmem:[#allocation9 + $0x28] sm:$0xff] %v398
      %407 = vst [vmem:[#allocation9 + $0x30] sm:$0xff] %v399
      %408 = vst [vmem:[#allocation9 + $0x38] sm:$0xff] %v400
    $region41: #{tpu_custom_call.1} parent=1 // pred_fallthru
      _
    // Predicated region
    $region42: #{tpu_custom_call.1} parent=1 // pred_check
      _
    $region43: #{tpu_custom_call.1} parent=1 // pred_check_branch
      %410 = sbr.rel (0) target = $region45
    $region44: #{tpu_custom_call.1} parent=1 // pred_region
      %412 = vsyncadd [#allocation5], 0
      %s413 = sshll.u32 [#allocation9], 4
      %s414 = int_to_ptr.vmem [resolvable:$true] %s413
      %s415 = sshll.u32 %s5, 4
      %s416 = int_to_ptr.hbm [resolvable:$true] %s415
      %421 = dma.vmem_to_hbm [thread:$0]  %s414, 1024, %s416, [#allocation5], 128, 128, 8
    $region45: #{tpu_custom_call.1} parent=1 // pred_fallthru
      _
    // Predicated region
    $region46: #{tpu_custom_call.1} parent=1 // pred_check
      _
    $region47: #{tpu_custom_call.1} parent=1 // pred_check_branch
      %423 = sbr.rel (0) target = $region49
    $region48: #{tpu_custom_call.1} parent=1 // pred_region
      %425 = dma.done [#allocation5], 1024
    $region49: #{tpu_custom_call.1} parent=1 // pred_fallthru
      _
    %426 = vsyncpa [#allocation4], 1
    %427 = vsyncpa [#allocation7], 1
    %428 = vsyncpa [#allocation5], 1

</llo_original>
